<compile_context>
chip_gen: v5e
topology: v5e:2x2
jax: 0.10.0
libtpu: 0.0.40
codegen_flags: <defaults>
</compile_context>

<pallas_src>
import functools

import jax
import jax.numpy as jnp
from jax.experimental import pallas as pl
from jax.experimental.pallas import tpu as pltpu


def _int_pow(x, n):
    """x ** n for a static python int n >= 1, via exponentiation-by-squaring."""
    assert n >= 1
    result = None
    base = x
    while n > 0:
        if n & 1:
            result = base if result is None else result * base
        n >>= 1
        if n:
            base = base * base
    return result


def _abs_pow(y, m):
    """|y| ** m with the cheapest VPU sequence for static integer m."""
    if isinstance(m, int) and m >= 1:
        if m % 2 == 0:
            return _int_pow(y * y, m // 2)        # even m: abs not needed
        return _int_pow(jnp.abs(y), m)
    return jnp.abs(y) ** m                        # generic fallback (EUP)


def _base_sum_kernel(x_ref, out_ref, *, m, valid_cols, tile_c, sub):
    """Partial sum of |x + 1|^m over one (sub, tile_c) lane tile -> out_ref[0, 0]."""
    i = pl.program_id(0)

    def tile_sum(mask_tail):
        x = x_ref[...].astype(jnp.float32)        # (sub, tile_c), lane-dense
        p = _abs_pow(x + 1.0, m)
        if mask_tail:
            col = jax.lax.broadcasted_iota(jnp.int32, (sub, tile_c), 1) + i * tile_c
            p = jnp.where(col < valid_cols, p, 0.0)
        if tile_c % 128 == 0 and tile_c >= 256:
            # VPU-only fold across lane groups, then one small cross-lane reduce.
            folded = jnp.sum(p.reshape(sub, tile_c // 128, 128), axis=1)
            return jnp.sum(folded)
        return jnp.sum(p)

    if valid_cols % tile_c == 0:
        # No ragged tail anywhere: never mask.
        out_ref[0, 0] = tile_sum(False)
    else:
        last = pl.num_programs(0) - 1

        @pl.when(i != last)
        def _():
            out_ref[0, 0] = tile_sum(False)

        @pl.when(i == last)
        def _():
            out_ref[0, 0] = tile_sum(True)


def power_loss(c, t, *, m=6, tile_c=262144):
    """SoftHebb PowerLoss: sum(|c - (+/-1 one-hot of t)| ** m).

    c: (B, nb_output) float predictions; t: (B,) int labels. Returns scalar f32.
    """
    batch, nb_output = c.shape
    t = t.astype(jnp.int32)
    total = batch * nb_output

    # ---- B-element per-row correction (plain JAX: negligible work) --------------
    picked = jnp.take_along_axis(c, t[:, None], axis=1)[:, 0].astype(jnp.float32)
    corr = jnp.sum(_abs_pow(picked - 1.0, m) - _abs_pow(picked + 1.0, m))

    # ---- base term: sum |c + 1|^m over every element (Pallas kernel) ------------
    # Free, contiguous reshape to a lane-dense 2-D view (no transpose, no pad).
    sub = next(s for s in (8, 4, 2, 1) if total % s == 0)
    cols = total // sub
    x2d = c.reshape(sub, cols)

    tile_c = max(128, (int(tile_c) // 128) * 128)
    if cols <= tile_c:
        tile_c = cols                              # single full-width block, no tail
    num_tiles = int(pl.cdiv(cols, tile_c))

    kernel = functools.partial(_base_sum_kernel, m=m, valid_cols=cols,
                               tile_c=tile_c, sub=sub)

    itemsize = jnp.dtype(c.dtype).itemsize
    block_bytes = sub * tile_c * itemsize
    vmem_bytes = max(32 << 20, 2 * block_bytes + (8 << 20))

    partials = pl.pallas_call(
        kernel,
        out_shape=jax.ShapeDtypeStruct((num_tiles, 1), jnp.float32),
        grid=(num_tiles,),
        in_specs=[pl.BlockSpec((sub, tile_c), lambda i: (0, i))],
        out_specs=pl.BlockSpec((1, 1), lambda i: (i, 0),
                               memory_space=pltpu.MemorySpace.SMEM),
        compiler_params=pltpu.CompilerParams(
            dimension_semantics=("parallel",),
            vmem_limit_bytes=int(vmem_bytes)),
        cost_estimate=pl.CostEstimate(
            flops=6 * total,
            transcendentals=0,
            bytes_accessed=int(total * itemsize) + 4 * num_tiles),
    )(x2d)

    return jnp.sum(partials) + corr


if __name__ == "__main__":
    nb_output = 10

    def reference(c, t, m):
        onehot = jnp.where(
            jax.nn.one_hot(t, nb_output, dtype=jnp.float32) == 0.0, -1.0, 1.0)
        return jnp.sum(jnp.abs(c - onehot) ** m)

    key = jax.random.PRNGKey(0)
    # (batch, m, tile_c): small shapes consistent with the module; the third case
    # forces a multi-tile grid with a ragged (masked) final tile; the fourth
    # exercises the odd-exponent path.
    cases = [
        (8, 6, None),
        (300, 6, None),
        (300, 6, 128),
        (300, 3, None),
    ]
    for batch, m, tc in cases:
        kc, kt, key = jax.random.split(key, 3)
        c = jax.random.normal(kc, (batch, nb_output), dtype=jnp.float32)
        t = jax.random.randint(kt, (batch,), 0, nb_output, dtype=jnp.int32)

        kwargs = {} if tc is None else {"tile_c": tc}
        loss = power_loss(c, t, m=m, **kwargs)
        jax.block_until_ready(loss)

        ref = reference(c, t, m)
        assert jnp.allclose(loss, ref, rtol=1e-5, atol=1e-3), (batch, m, loss, ref)

    print("KERNEL_OK")
</pallas_src>

<mosaic_0001>
module attributes {stable_mosaic.version = 11 : i64} {
  func.func @_base_sum_kernel(%arg0: i32, %arg1: memref<8x10xf32, #tpu.memory_space<vmem>>, %arg2: memref<1x1xf32, #tpu.memory_space<smem>>) attributes {dimension_semantics = [#tpu.dimension_semantics<parallel>], iteration_bounds = array<i64: 1>, scalar_prefetch = 0 : i64, scratch_operands = 0 : i64, tpu.core_type = #tpu.core_type<tc>, window_params = [{transform_indices = @transform_0, window_bounds = array<i64: 8, 10>}, {transform_indices = @transform_1, window_bounds = array<i64: 1, 1>}]} {
    %c0 = arith.constant 0 : index
    %c0_0 = arith.constant 0 : index
    %0 = vector.load %arg1[%c0, %c0_0] : memref<8x10xf32, #tpu.memory_space<vmem>>, vector<8x10xf32>
    %cst = arith.constant 1.000000e+00 : f32
    %1 = vector.broadcast %cst : f32 to vector<8x10xf32>
    %2 = arith.addf %0, %1 : vector<8x10xf32>
    %3 = arith.mulf %2, %2 : vector<8x10xf32>
    %4 = arith.mulf %3, %3 : vector<8x10xf32>
    %5 = arith.mulf %3, %4 : vector<8x10xf32>
    %6 = vector.shape_cast %5 : vector<8x10xf32> to vector<1x8x10xf32>
    %cst_1 = arith.constant dense<0.000000e+00> : vector<1xf32>
    %7 = vector.multi_reduction <add>, %6, %cst_1 [1, 2] : vector<1x8x10xf32> to vector<1xf32>
    %8 = vector.shape_cast %7 : vector<1xf32> to vector<1x1x1xf32>
    %9 = vector.extract %8[0, 0, 0] : f32 from vector<1x1x1xf32>
    %c0_2 = arith.constant 0 : index
    %c0_3 = arith.constant 0 : index
    %10 = memref.load %arg2[%c0_2, %c0_3] : memref<1x1xf32, #tpu.memory_space<smem>>
    memref.store %9, %arg2[%c0_2, %c0_3] : memref<1x1xf32, #tpu.memory_space<smem>>
    return
  }
  func.func @transform_0(%arg0: i32) -> (i32, i32) {
    %c0_i32 = arith.constant 0 : i32
    %c0_i32_0 = arith.constant 0 : i32
    return %c0_i32, %arg0 : i32, i32
  }
  func.func @transform_1(%arg0: i32) -> (i32, i32) {
    %c0_i32 = arith.constant 0 : i32
    %c0_i32_0 = arith.constant 0 : i32
    return %arg0, %c0_i32 : i32, i32
  }
}

</mosaic_0001>

<llo_original>
// kernel: tpu_custom_call.1
$region0: #{tpu_custom_call.1}
  #allocation0 [shape = 'u32[]', space=smem, size = 0x4, offset = 0x4, fixed_abs, tag = 'smem constant byte address 0x4 - core index']
  #allocation1 [shape = 'u32[72,128]{1,0:T(1,128)}', space=vmem, size = 0x9000, scoped, tag = 'internal scratch']
  %s0 = inlined_call_operand.hbm [shape: f32[8,10], index: 0, kind: input, shape index: {}]
  %s1 = inlined_call_operand.hbm [shape: f32[1,1], index: 1, kind: output, shape index: {}]
  %s2 = sld [smem:[#allocation0]]
  $region18: #{tpu_custom_call.1} parent=0
    _
  %s4 = ssub.s32 1, %s2
  %s5 = scalar_select 0, %s4, %s2
  $region1: #{tpu_custom_call.1} parent=0
    #allocation2 [shape = 'u8[4096]{0}', space=vmem, size = 0x1000, scoped, tag = 'input window, operand 0, single buffered']
    #allocation3 [shape = 's32[1]{0}', space=sflag, size = 0x4, scoped, tag = 'scoped memory for tpu_custom_call.1']
    #allocation4 [shape = 's32[1]{0}', space=sflag, size = 0x4, scoped, tag = 'scoped memory for tpu_custom_call.1']
    #allocation5 [shape = 'u8[512]{0}', space=smem, size = 0x200, scoped, tag = 'output window, operand 0, single buffered']
    %6 = vsyncpa [#allocation3], 0
    %7 = vsyncpa [#allocation4], 0
    // Predicated region
    $region2: #{tpu_custom_call.1} parent=1 // pred_check
      _
    $region3: #{tpu_custom_call.1} parent=1 // pred_check_branch
      %9 = sbr.rel (0) target = $region5
    $region4: #{tpu_custom_call.1} parent=1 // pred_region
      %11 = vsyncadd [#allocation3], 0
      %s13 = sshll.u32 %s0, 4
      %s14 = int_to_ptr.hbm [resolvable:$true] %s13
      %s15 = sshll.u32 [#allocation2], 4
      %s16 = int_to_ptr.vmem [resolvable:$true] %s15
      %18 = dma.hbm_to_vmem [thread:$0]  %s14, 128, %s16, [#allocation3]
    $region5: #{tpu_custom_call.1} parent=1 // pred_fallthru
      _
    // Predicated region
    $region6: #{tpu_custom_call.1} parent=1 // pred_check
      _
    $region7: #{tpu_custom_call.1} parent=1 // pred_check_branch
      %20 = sbr.rel (0) target = $region9
    $region8: #{tpu_custom_call.1} parent=1 // pred_region
      %22 = dma.done [#allocation3], 128
    $region9: #{tpu_custom_call.1} parent=1 // pred_fallthru
      _
    %v23 = vld [vmem:[#allocation2] sm:$0xff]
    %v24 = vadd.f32 %v23, 1.0
    %v25 = vmul.f32 %v24, %v24
    %v26 = vmul.f32 %v25, %v25
    %v27 = vmul.f32 %v25, %v26
    %vm28 = vcmask 80896
    %v29 = vsel %vm28, %v27, 0.0
    %30 = vadd.xlane.f32.xlu0 %v29
    %v31 = vpop.xlane.xlu0 %30
    %v32 = vrot.slane %v31, 4
    %v33 = vadd.f32 %v31, %v32
    %v34 = vrot.slane %v33, 2
    %v35 = vadd.f32 %v33, %v34
    %v36 = vrot.slane %v35, 1
    %v37 = vadd.f32 %v35, %v36
    %s38 = vtos %v37
    %s39 = scalar_lea.smem [#allocation5], 0
    %40 = sst [smem:[%s39]] %s38
    // Predicated region
    $region10: #{tpu_custom_call.1} parent=1 // pred_check
      _
    $region11: #{tpu_custom_call.1} parent=1 // pred_check_branch
      %42 = sbr.rel (0) target = $region13
    $region12: #{tpu_custom_call.1} parent=1 // pred_region
      %44 = vsyncadd [#allocation4], 0
      %s46 = sshll.u32 %s1, 4
      %s47 = int_to_ptr.hbm [resolvable:$true] %s46
      %49 = dma.smem_to_hbm [#allocation5], 16, %s47, [#allocation4]
    $region13: #{tpu_custom_call.1} parent=1 // pred_fallthru
      _
    // Predicated region
    $region14: #{tpu_custom_call.1} parent=1 // pred_check
      _
    $region15: #{tpu_custom_call.1} parent=1 // pred_check_branch
      %51 = sbr.rel (0) target = $region17
    $region16: #{tpu_custom_call.1} parent=1 // pred_region
      %53 = dma.done [#allocation4], 16
    $region17: #{tpu_custom_call.1} parent=1 // pred_fallthru
      _
    %54 = sfence
    %55 = vsyncpa [#allocation3], 1
    %56 = vsyncpa [#allocation4], 1

</llo_original>
